<compile_context>
chip_gen: v6e
topology: v6e:2x2x1
jax: 0.10.0
libtpu: 0.0.40
codegen_flags: <defaults>
</compile_context>

<pallas_src>
import functools

import jax
import jax.numpy as jnp
import numpy as np
from jax.experimental import pallas as pl
from jax.experimental.pallas import tpu as pltpu

_TILE_HW_MAX = 32768  # lanes per HW tile (~6 MiB/tile footprint incl. buffers)


def _round_up(v, m):
    return ((v + m - 1) // m) * m


def _pool_pass_kernel(x_ref, w1_ref, b1_ref, alpha_ref, wfc1_ref, wfc2_ref,
                      gate_ref, acc_ref, *, hw_true, tile_hw, needs_mask):
    # x_ref:    (C_in,  T)   bf16, one batch element, one HW tile
    # w1_ref:   (C_out, C_in) bf16 conv1x1 weight
    # b1_ref:   (C_out, 1)    f32 conv1x1 bias
    # alpha_ref:(1,) SMEM     f32 PReLU shared slope
    # wfc1_ref: (C_out, C_hid) f32 SE fc1 weight (transposed)
    # wfc2_ref: (C_out, C_hid) f32 SE fc2 weight (PyTorch layout)
    # gate_ref: (C_out, 1)    f32 output: sigmoid channel gate
    # acc_ref:  (C_out, 1)    f32 scratch: pooled-sum accumulator
    t = pl.program_id(1)

    @pl.when(t == 0)
    def _():
        acc_ref[...] = jnp.zeros_like(acc_ref)

    # 1x1 conv: bf16 operands straight to the MXU, f32 accumulation.
    out = jnp.dot(w1_ref[...], x_ref[...],
                  preferred_element_type=jnp.float32) + b1_ref[...]
    # PReLU (single shared slope from SMEM).
    alpha = alpha_ref[0]
    out = jnp.where(out > 0, out, alpha * out)

    if needs_mask:
        # Zero padded lanes so they don't pollute the pooled mean.
        lane = jax.lax.broadcasted_iota(jnp.int32, out.shape, 1) + t * tile_hw
        out = jnp.where(lane < hw_true, out, 0.0)

    acc_ref[...] += jnp.sum(out, axis=1, keepdims=True)

    @pl.when(t == pl.num_programs(1) - 1)
    def _():
        # SE block on VPU/XLU (too tiny for the MXU).
        pooled = acc_ref[...] * (1.0 / hw_true)                      # (C_out,1)
        h = jnp.maximum(
            jnp.sum(wfc1_ref[...] * pooled, axis=0, keepdims=True), 0.0)  # (1,C_hid)
        s = jax.nn.sigmoid(
            jnp.sum(wfc2_ref[...] * h, axis=1, keepdims=True))            # (C_out,1)
        gate_ref[...] = s


def _rescale_pass_kernel(x_ref, w1_ref, b1_ref, alpha_ref, gate_ref, o_ref):
    # Recompute conv + PReLU from x (cheaper than spilling the f32/bf16
    # pre-scale activation to HBM since C_in << C_out), then apply the gate.
    out = jnp.dot(w1_ref[...], x_ref[...],
                  preferred_element_type=jnp.float32) + b1_ref[...]
    alpha = alpha_ref[0]
    out = jnp.where(out > 0, out, alpha * out)
    o_ref[...] = (out * gate_ref[...]).astype(o_ref.dtype)


def fea_block(x_nchw, w1, b1, alpha, wfc1, wfc2, *,
              tile_hw=None, compute_dtype=jnp.bfloat16):
    """FeaBlock forward (PyTorch-native parameter layouts, weight_norm folded).

    Args:
      x_nchw: (B, C_in, H, W) activations
      w1:     (C_out, C_in)   conv1x1 effective weight
      b1:     (C_out,)        conv1x1 bias
      alpha:  ()              PReLU shared slope
      wfc1:   (C_hid, C_out)  SE fc1 weight (bias=False)
      wfc2:   (C_out, C_hid)  SE fc2 weight (bias=False)
    Returns (B, C_out, H, W) in x_nchw.dtype.
    """
    B, C_in, H, W = x_nchw.shape
    C_out = w1.shape[0]
    C_hid = wfc1.shape[0]
    hw = H * W
    out_dtype = x_nchw.dtype

    # Tile sizing: lane dim is always a multiple of 128 (unmasked vst), capped
    # so double-buffered tiles fit comfortably in scoped VMEM on every gen.
    if tile_hw is None:
        tile_hw = min(_TILE_HW_MAX, _round_up(hw, 128))
    tile_hw = max(128, _round_up(int(tile_hw), 128))
    hw_pad = _round_up(hw, tile_hw)
    num_tiles = hw_pad // tile_hw
    needs_mask = hw_pad != hw

    # NCHW -> (B, C_in, HW): pure reshape; explicit bf16 compute dtype policy.
    x = x_nchw.reshape(B, C_in, hw).astype(compute_dtype)
    if needs_mask:
        x = jnp.pad(x, ((0, 0), (0, 0), (0, hw_pad - hw)))

    w1_k = w1.astype(compute_dtype)                          # bf16 to the MXU
    b1_k = b1.reshape(C_out, 1).astype(jnp.float32)
    alpha_k = jnp.reshape(alpha, (1,)).astype(jnp.float32)   # SMEM scalar
    wfc1_t = jnp.transpose(wfc1).astype(jnp.float32)         # (C_out, C_hid)
    wfc2_k = wfc2.astype(jnp.float32)                        # (C_out, C_hid)

    cparams_pool = pltpu.CompilerParams(
        dimension_semantics=("parallel", "arbitrary"),       # tile axis reduces
        vmem_limit_bytes=32 * 1024 * 1024,
    )
    cparams_scale = pltpu.CompilerParams(
        dimension_semantics=("parallel", "parallel"),        # v7x: both TCs
        vmem_limit_bytes=32 * 1024 * 1024,
    )

    # ---- Pass 1: pooled sum -> SE gate (B, C_out, 1) ----
    gate = pl.pallas_call(
        functools.partial(_pool_pass_kernel, hw_true=hw, tile_hw=tile_hw,
                          needs_mask=needs_mask),
        out_shape=jax.ShapeDtypeStruct((B, C_out, 1), jnp.float32),
        grid_spec=pltpu.PrefetchScalarGridSpec(
            num_scalar_prefetch=0,
            grid=(B, num_tiles),
            in_specs=[
                pl.BlockSpec((None, C_in, tile_hw), lambda b, t: (b, 0, t)),
                pl.BlockSpec((C_out, C_in), lambda b, t: (0, 0)),
                pl.BlockSpec((C_out, 1), lambda b, t: (0, 0)),
                pl.BlockSpec(memory_space=pltpu.MemorySpace.SMEM),
                pl.BlockSpec((C_out, C_hid), lambda b, t: (0, 0)),
                pl.BlockSpec((C_out, C_hid), lambda b, t: (0, 0)),
            ],
            out_specs=pl.BlockSpec((None, C_out, 1), lambda b, t: (b, 0, 0)),
            scratch_shapes=[pltpu.VMEM((C_out, 1), jnp.float32)],
        ),
        compiler_params=cparams_pool,
    )(x, w1_k, b1_k, alpha_k, wfc1_t, wfc2_k)

    # ---- Pass 2: recompute conv + PReLU, apply gate, store bf16 ----
    out = pl.pallas_call(
        _rescale_pass_kernel,
        out_shape=jax.ShapeDtypeStruct((B, C_out, hw_pad), out_dtype),
        grid_spec=pltpu.PrefetchScalarGridSpec(
            num_scalar_prefetch=0,
            grid=(B, num_tiles),
            in_specs=[
                pl.BlockSpec((None, C_in, tile_hw), lambda b, t: (b, 0, t)),
                pl.BlockSpec((C_out, C_in), lambda b, t: (0, 0)),
                pl.BlockSpec((C_out, 1), lambda b, t: (0, 0)),
                pl.BlockSpec(memory_space=pltpu.MemorySpace.SMEM),
                pl.BlockSpec((None, C_out, 1), lambda b, t: (b, 0, 0)),
            ],
            out_specs=pl.BlockSpec((None, C_out, tile_hw), lambda b, t: (b, 0, t)),
        ),
        compiler_params=cparams_scale,
    )(x, w1_k, b1_k, alpha_k, gate)

    if needs_mask:
        out = out[:, :, :hw]
    return out.reshape(B, C_out, H, W)


def reference(x_nchw, w1, b1, alpha, wfc1, wfc2):
    """Pure-JAX (f32) reference mirroring the PyTorch forward."""
    out = jnp.einsum("bihw,oi->bohw", x_nchw, w1) + b1[None, :, None, None]
    out = jnp.where(out > 0, out, alpha * out)                 # PReLU
    pooled = jnp.mean(out, axis=(2, 3))                        # (B, C_out)
    h = jnp.maximum(pooled @ wfc1.T, 0.0)                      # fc1 + ReLU
    s = jax.nn.sigmoid(h @ wfc2.T)                             # fc2 + sigmoid
    return out * s[:, :, None, None]


if __name__ == "__main__":
    B, C_in, H, W = 2, 4, 16, 16
    C_out = 16
    C_hid = C_out // 8  # SE reduction = 8

    key = jax.random.PRNGKey(0)
    k_x, k_w1, k_b1, k_f1, k_f2 = jax.random.split(key, 5)

    x = jax.random.normal(k_x, (B, C_in, H, W), dtype=jnp.float32)
    w1 = jax.random.normal(k_w1, (C_out, C_in), dtype=jnp.float32) * 0.1
    b1 = jax.random.normal(k_b1, (C_out,), dtype=jnp.float32) * 0.1
    alpha = jnp.array(0.25, dtype=jnp.float32)   # nn.PReLU() default init
    wfc1 = jax.random.normal(k_f1, (C_hid, C_out), dtype=jnp.float32) * 0.1
    wfc2 = jax.random.normal(k_f2, (C_out, C_hid), dtype=jnp.float32) * 0.1

    # bf16 activations / conv weight at the HBM boundary; f32 accumulation.
    x_bf = x.astype(jnp.bfloat16)
    w1_bf = w1.astype(jnp.bfloat16)

    # Reference in f32 on identical (bf16-rounded) operand values, isolating
    # kernel arithmetic from input quantization.
    y_ref = reference(x_bf.astype(jnp.float32), w1_bf.astype(jnp.float32),
                      b1, alpha, wfc1, wfc2)
    y_ref = np.asarray(jax.block_until_ready(y_ref))

    # (a) default tile (single HW tile per batch element).
    y = jax.block_until_ready(fea_block(x_bf, w1_bf, b1, alpha, wfc1, wfc2))
    np.testing.assert_allclose(np.asarray(y.astype(jnp.float32)), y_ref,
                               rtol=2e-2, atol=2e-2)

    # (b) forced small tile -> exercises multi-tile pool-accumulate path.
    y2 = jax.block_until_ready(
        fea_block(x_bf, w1_bf, b1, alpha, wfc1, wfc2, tile_hw=128))
    np.testing.assert_allclose(np.asarray(y2.astype(jnp.float32)), y_ref,
                               rtol=2e-2, atol=2e-2)

    # (c) odd spatial size -> exercises HW padding + pooled-mean masking path.
    Ho = Wo = 15
    x_odd = jax.random.normal(jax.random.PRNGKey(1), (1, C_in, Ho, Wo),
                              dtype=jnp.float32).astype(jnp.bfloat16)
    y3 = jax.block_until_ready(
        fea_block(x_odd, w1_bf, b1, alpha, wfc1, wfc2, tile_hw=128))
    y3_ref = np.asarray(jax.block_until_ready(
        reference(x_odd.astype(jnp.float32), w1_bf.astype(jnp.float32),
                  b1, alpha, wfc1, wfc2)))
    np.testing.assert_allclose(np.asarray(y3.astype(jnp.float32)), y3_ref,
                               rtol=2e-2, atol=2e-2)

    print("KERNEL_OK")
</pallas_src>

<mosaic_0001>
module attributes {stable_mosaic.version = 11 : i64} {
  func.func @_pool_pass_kernel(%arg0: i32, %arg1: i32, %arg2: memref<1x4x256xbf16, #tpu.memory_space<vmem>>, %arg3: memref<16x4xbf16, #tpu.memory_space<vmem>>, %arg4: memref<16x1xf32, #tpu.memory_space<vmem>>, %arg5: memref<1xf32, #tpu.memory_space<smem>>, %arg6: memref<16x2xf32, #tpu.memory_space<vmem>>, %arg7: memref<16x2xf32, #tpu.memory_space<vmem>>, %arg8: memref<1x16x1xf32, #tpu.memory_space<vmem>>, %arg9: memref<16x1xf32, #tpu.memory_space<vmem>>) attributes {dimension_semantics = [#tpu.dimension_semantics<parallel>, #tpu.dimension_semantics<arbitrary>], iteration_bounds = array<i64: 2, 1>, scalar_prefetch = 0 : i64, scratch_operands = 1 : i64, tpu.core_type = #tpu.core_type<tc>, window_params = [{transform_indices = @transform_0, window_bounds = array<i64: 1, 4, 256>}, {pipeline_mode = #tpu.pipeline_mode<synchronous>, transform_indices = @transform_1, window_bounds = array<i64: 16, 4>}, {pipeline_mode = #tpu.pipeline_mode<synchronous>, transform_indices = @transform_2, window_bounds = array<i64: 16, 1>}, {transform_indices = @transform_3, window_bounds = array<i64: 1>}, {pipeline_mode = #tpu.pipeline_mode<synchronous>, transform_indices = @transform_4, window_bounds = array<i64: 16, 2>}, {pipeline_mode = #tpu.pipeline_mode<synchronous>, transform_indices = @transform_5, window_bounds = array<i64: 16, 2>}, {transform_indices = @transform_6, window_bounds = array<i64: 1, 16, 1>}]} {
    %c0_i32 = arith.constant 0 : i32
    %0 = arith.cmpi eq, %arg1, %c0_i32 : i32
    %1 = arith.extui %0 : i1 to i32
    %c0_i32_0 = arith.constant 0 : i32
    %2 = arith.cmpi ne, %1, %c0_i32_0 : i32
    scf.if %2 {
      %cst_16 = arith.constant 0.000000e+00 : f32
      %24 = vector.broadcast %cst_16 : f32 to vector<16x1xf32>
      %c0_17 = arith.constant 0 : index
      %c0_18 = arith.constant 0 : index
      %25 = vector.load %arg9[%c0_17, %c0_18] : memref<16x1xf32, #tpu.memory_space<vmem>>, vector<16x1xf32>
      tpu.vector_store %arg9[%c0_17, %c0_18], %24 {strides = array<i32>} : memref<16x1xf32, #tpu.memory_space<vmem>>, vector<16x1xf32>,
    } else {
    }
    %c0 = arith.constant 0 : index
    %c0_1 = arith.constant 0 : index
    %3 = vector.load %arg3[%c0, %c0_1] : memref<16x4xbf16, #tpu.memory_space<vmem>>, vector<16x4xbf16>
    %c0_2 = arith.constant 0 : index
    %c0_3 = arith.constant 0 : index
    %c0_4 = arith.constant 0 : index
    %4 = vector.load %arg2[%c0_2, %c0_3, %c0_4] : memref<1x4x256xbf16, #tpu.memory_space<vmem>>, vector<1x4x256xbf16>
    %5 = vector.shape_cast %4 : vector<1x4x256xbf16> to vector<4x256xbf16>
    %cst = arith.constant dense<0.000000e+00> : vector<16x256xf32>
    %6 = tpu.matmul %3, %5, %cst {dimension_numbers = #tpu.dot_dimension_numbers<[1], [0], [0], [1], [0, 0, 1, 1], [], []>} : vector<16x4xbf16>, vector<4x256xbf16>, vector<16x256xf32> -> vector<16x256xf32>
    %c0_5 = arith.constant 0 : index
    %c0_6 = arith.constant 0 : index
    %7 = vector.load %arg4[%c0_5, %c0_6] : memref<16x1xf32, #tpu.memory_space<vmem>>, vector<16x1xf32>
    %8 = vector.broadcast %7 : vector<16x1xf32> to vector<16x256xf32>
    %9 = arith.addf %6, %8 : vector<16x256xf32>
    %c0_7 = arith.constant 0 : index
    %10 = memref.load %arg5[%c0_7] : memref<1xf32, #tpu.memory_space<smem>>
    %cst_8 = arith.constant 0.000000e+00 : f32
    %11 = vector.broadcast %cst_8 : f32 to vector<16x256xf32>
    %12 = arith.cmpf ogt, %9, %11 : vector<16x256xf32>
    %13 = vector.broadcast %10 : f32 to vector<16x256xf32>
    %14 = arith.mulf %13, %9 : vector<16x256xf32>
    %15 = arith.select %12, %9, %14 : vector<16x256xi1>, vector<16x256xf32>
    %c0_9 = arith.constant 0 : index
    %c0_10 = arith.constant 0 : index
    %16 = vector.load %arg9[%c0_9, %c0_10] : memref<16x1xf32, #tpu.memory_space<vmem>>, vector<16x1xf32>
    %cst_11 = arith.constant dense<0.000000e+00> : vector<16xf32>
    %17 = vector.multi_reduction <add>, %15, %cst_11 [1] : vector<16x256xf32> to vector<16xf32>
    %18 = vector.shape_cast %17 : vector<16xf32> to vector<16x1xf32>
    %19 = arith.addf %16, %18 : vector<16x1xf32>
    %c0_12 = arith.constant 0 : index
    %c0_13 = arith.constant 0 : index
    %20 = vector.load %arg9[%c0_12, %c0_13] : memref<16x1xf32, #tpu.memory_space<vmem>>, vector<16x1xf32>
    tpu.vector_store %arg9[%c0_12, %c0_13], %19 {strides = array<i32>} : memref<16x1xf32, #tpu.memory_space<vmem>>, vector<16x1xf32>,
    %c0_i32_14 = arith.constant 0 : i32
    %21 = arith.cmpi eq, %arg1, %c0_i32_14 : i32
    %22 = arith.extui %21 : i1 to i32
    %c0_i32_15 = arith.constant 0 : i32
    %23 = arith.cmpi ne, %22, %c0_i32_15 : i32
    scf.if %23 {
      %c0_16 = arith.constant 0 : index
      %c0_17 = arith.constant 0 : index
      %24 = vector.load %arg9[%c0_16, %c0_17] : memref<16x1xf32, #tpu.memory_space<vmem>>, vector<16x1xf32>
      %cst_18 = arith.constant 3.906250e-03 : f32
      %25 = vector.broadcast %cst_18 : f32 to vector<16x1xf32>
      %26 = arith.mulf %24, %25 : vector<16x1xf32>
      %c0_19 = arith.constant 0 : index
      %c0_20 = arith.constant 0 : index
      %27 = vector.load %arg6[%c0_19, %c0_20] : memref<16x2xf32, #tpu.memory_space<vmem>>, vector<16x2xf32>
      %28 = vector.broadcast %26 : vector<16x1xf32> to vector<16x2xf32>
      %29 = arith.mulf %27, %28 : vector<16x2xf32>
      %cst_21 = arith.constant dense<0.000000e+00> : vector<2xf32>
      %30 = vector.multi_reduction <add>, %29, %cst_21 [0] : vector<16x2xf32> to vector<2xf32>
      %31 = vector.shape_cast %30 : vector<2xf32> to vector<1x2xf32>
      %cst_22 = arith.constant 0.000000e+00 : f32
      %32 = vector.broadcast %cst_22 : f32 to vector<1x2xf32>
      %33 = arith.maximumf %31, %32 : vector<1x2xf32>
      %c0_23 = arith.constant 0 : index
      %c0_24 = arith.constant 0 : index
      %34 = vector.load %arg7[%c0_23, %c0_24] : memref<16x2xf32, #tpu.memory_space<vmem>>, vector<16x2xf32>
      %35 = vector.broadcast %33 : vector<1x2xf32> to vector<16x2xf32>
      %36 = arith.mulf %34, %35 : vector<16x2xf32>
      %cst_25 = arith.constant dense<0.000000e+00> : vector<16xf32>
      %37 = vector.multi_reduction <add>, %36, %cst_25 [1] : vector<16x2xf32> to vector<16xf32>
      %38 = vector.shape_cast %37 : vector<16xf32> to vector<16x1xf32>
      %39 = arith.negf %38 : vector<16x1xf32>
      %40 = math.exp %39 : vector<16x1xf32>
      %cst_26 = arith.constant 1.000000e+00 : f32
      %41 = vector.broadcast %cst_26 : f32 to vector<16x1xf32>
      %42 = arith.addf %41, %40 : vector<16x1xf32>
      %43 = arith.divf %41, %42 : vector<16x1xf32>
      %c0_27 = arith.constant 0 : index
      %c0_28 = arith.constant 0 : index
      %c0_29 = arith.constant 0 : index
      %44 = vector.load %arg8[%c0_27, %c0_28, %c0_29] : memref<1x16x1xf32, #tpu.memory_space<vmem>>, vector<1x16x1xf32>
      %45 = vector.shape_cast %44 : vector<1x16x1xf32> to vector<16x1xf32>
      %46 = vector.shape_cast %43 : vector<16x1xf32> to vector<1x16x1xf32>
      tpu.vector_store %arg8[%c0_27, %c0_28, %c0_29], %46 {strides = array<i32>} : memref<1x16x1xf32, #tpu.memory_space<vmem>>, vector<1x16x1xf32>,
    } else {
    }
    return
  }
  func.func @transform_0(%arg0: i32, %arg1: i32) -> (i32, i32, i32) {
    %c0_i32 = arith.constant 0 : i32
    %c0_i32_0 = arith.constant 0 : i32
    return %arg0, %c0_i32, %arg1 : i32, i32, i32
  }
  func.func @transform_1(%arg0: i32, %arg1: i32) -> (i32, i32) {
    %c0_i32 = arith.constant 0 : i32
    %c0_i32_0 = arith.constant 0 : i32
    %c0_i32_1 = arith.constant 0 : i32
    return %c0_i32, %c0_i32_0 : i32, i32
  }
  func.func @transform_2(%arg0: i32, %arg1: i32) -> (i32, i32) {
    %c0_i32 = arith.constant 0 : i32
    %c0_i32_0 = arith.constant 0 : i32
    %c0_i32_1 = arith.constant 0 : i32
    return %c0_i32, %c0_i32_0 : i32, i32
  }
  func.func @transform_3(%arg0: i32, %arg1: i32) -> i32 {
    %c0_i32 = arith.constant 0 : i32
    %c0_i32_0 = arith.constant 0 : i32
    return %c0_i32 : i32
  }
  func.func @transform_4(%arg0: i32, %arg1: i32) -> (i32, i32) {
    %c0_i32 = arith.constant 0 : i32
    %c0_i32_0 = arith.constant 0 : i32
    %c0_i32_1 = arith.constant 0 : i32
    return %c0_i32, %c0_i32_0 : i32, i32
  }
  func.func @transform_5(%arg0: i32, %arg1: i32) -> (i32, i32) {
    %c0_i32 = arith.constant 0 : i32
    %c0_i32_0 = arith.constant 0 : i32
    %c0_i32_1 = arith.constant 0 : i32
    return %c0_i32, %c0_i32_0 : i32, i32
  }
  func.func @transform_6(%arg0: i32, %arg1: i32) -> (i32, i32, i32) {
    %c0_i32 = arith.constant 0 : i32
    %c0_i32_0 = arith.constant 0 : i32
    %c0_i32_1 = arith.constant 0 : i32
    return %arg0, %c0_i32, %c0_i32_0 : i32, i32, i32
  }
}

</mosaic_0001>

<llo_original>
// kernel: tpu_custom_call.1
$region0: #{tpu_custom_call.1}
  #allocation0 [shape = 'u32[]', space=smem, size = 0x4, offset = 0x4, fixed_abs, tag = 'smem constant byte address 0x4 - core index']
  #allocation1 [shape = 'u32[144,128]{1,0:T(1,128)}', space=vmem, size = 0x12000, scoped, tag = 'internal scratch']
  #allocation2 [shape = 'f32[16,1]{1,0:T(8,128)}', space=vmem, size = 0x2000, scoped, tag = 'scratch operand']
  #allocation3 [shape = 'f32[1]{0:T(128)S(6)}', space=smem, size = 0x200, scoped, tag = 'scoped memory for tpu_custom_call.1']
  %s0 = inlined_call_operand.vmem [shape: bf16[2,4,256], index: 0, kind: input, shape index: {}]
  %s1 = inlined_call_operand.vmem [shape: bf16[16,4], index: 1, kind: input, shape index: {}]
  %s2 = inlined_call_operand.vmem [shape: f32[16,1], index: 2, kind: input, shape index: {}]
  %s3 = inlined_call_operand.<no memory space> [shape: f32[1], index: 3, kind: input, shape index: {}]
  %s4 = inlined_call_operand.vmem [shape: f32[16,2], index: 4, kind: input, shape index: {}]
  %s5 = inlined_call_operand.vmem [shape: f32[16,2], index: 5, kind: input, shape index: {}]
  %s6 = inlined_call_operand.vmem [shape: f32[2,16,1], index: 6, kind: output, shape index: {}]
  %s7 = sld [smem:[#allocation0]]
  $region65: #{tpu_custom_call.1} parent=0
    _
  %s9 = ssub.s32 1, %s7
  %s10 = scalar_select 0, %s9, %s7
  %11 = sst [smem:[#allocation3]] %s3
  loop: start=0, step=1, limit=4
  $region2: #{tpu_custom_call.1} parent=0 // loop_pre_header
    _
  $region3: #{tpu_custom_call.1} parent=0 // loop_header
    %s13 = sphi 0, %s17
    %p14 = scmp.ge.s32.totalorder %s13, 4
    %s20 = sphi 0, %s32
    %s21 = sphi 0, %s28
    %s22 = sphi 0, %s20
    %s23 = sphi 0, %s21
    %s24 = sphi 0, %s22
    %s25 = sphi 0, %s23
    %s37 = sphi 0, %s39
    %s40 = sphi 0, %s37
    %s41 = sphi 0, %s40
    %s57 = sphi 0, %s41
    %s61 = sphi 0, %s61
    %s63 = sphi 0, %s61
    %s64 = sphi 0, %s63
    %s78 = sphi 0, %s64
    %s82 = sphi 0, %s82
    %s84 = sphi 0, %s82
    %s85 = sphi 0, %s84
    %s99 = sphi 0, %s85
    %s103 = sphi 0, %s103
    %s105 = sphi 0, %s103
    %s106 = sphi 0, %s105
    %s120 = sphi 0, %s106
    %s124 = sphi 0, %s124
    %s126 = sphi 0, %s124
    %s127 = sphi 0, %s126
    %s141 = sphi 0, %s127
    %s145 = sphi 0, %s145
    %s147 = sphi 0, %s145
    %s148 = sphi 0, %s147
    %s162 = sphi 0, %s148
    %s168 = sphi 0, %s170
    %s171 = sphi 0, %s168
    %s172 = sphi 0, %s171
    %s188 = sphi 0, %s172
  $region4: #{tpu_custom_call.1} parent=0 // loop_header_branch
    %16 = sbr.rel (%p14) target = $region8
  $region5: #{tpu_custom_call.1} parent=0 // loop_body
    %s18 = ssub.s32 %s13, 1
    %s19 = ssub.s32 %s13, 2
    %s26 = sadd.s32 1, %s21
    %p27 = scmp.ge.s32.totalorder %s26, 1
    %s28 = scalar_select %p27, 0, %s26
    %s29 = sadd.s32 1, %s20
    %s30 = scalar_select %p27, %s29, %s20
    %p31 = scmp.ge.s32.totalorder %s30, 2
    %s32 = scalar_select %p31, 0, %s30
    %s33 = ssub.s32 %s20, %s32
    %s34 = ssub.s32 %s21, %s28
    %s35 = sor.u32 %s33, %s34
    %p36 = scmp.eq.s32.totalorder %s35, 0
    %s38 = sadd.s32 %s37, 1
    %s39 = scalar_select %p36, %s37, %s38
    %p42 = pneg %p36
    %p43 = scmp.eq.s32.totalorder %s13, 1
    %p44 = por %p42, %p43
    %p45 = scmp.ne.s32.totalorder %s37, %s40
    %p46 = scmp.eq.s32.totalorder %s13, 0
    %p47 = por %p45, %p46
    %p48 = scmp.ne.s32.totalorder %s37, %s40
    %p49 = scmp.eq.s32.totalorder %s18, 1
    %p50 = por %p48, %p49
    %p51 = scmp.ne.s32.totalorder %s40, %s41
    %p52 = scmp.eq.s32.totalorder %s18, 0
    %p53 = por %p51, %p52
    %p54 = scmp.ne.s32.totalorder %s40, %s41
    %p55 = scmp.eq.s32.totalorder %s19, 1
    %p56 = por %p54, %p55
    %p58 = scmp.ne.s32.totalorder %s41, %s57
    %p59 = scmp.eq.s32.totalorder %s19, 0
    %p60 = por %p58, %p59
    %s62 = sadd.s32 %s61, 1
    %p65 = scmp.eq.s32.totalorder %s13, 1
    %p66 = scmp.ne.s32.totalorder %s61, %s63
    %p67 = scmp.eq.s32.totalorder %s13, 0
    %p68 = por %p66, %p67
    %p69 = scmp.ne.s32.totalorder %s61, %s63
    %p70 = scmp.eq.s32.totalorder %s18, 1
    %p71 = por %p69, %p70
    %p72 = scmp.ne.s32.totalorder %s63, %s64
    %p73 = scmp.eq.s32.totalorder %s18, 0
    %p74 = por %p72, %p73
    %p75 = scmp.ne.s32.totalorder %s63, %s64
    %p76 = scmp.eq.s32.totalorder %s19, 1
    %p77 = por %p75, %p76
    %p79 = scmp.ne.s32.totalorder %s64, %s78
    %p80 = scmp.eq.s32.totalorder %s19, 0
    %p81 = por %p79, %p80
    %s83 = sadd.s32 %s82, 1
    %p86 = scmp.eq.s32.totalorder %s13, 1
    %p87 = scmp.ne.s32.totalorder %s82, %s84
    %p88 = scmp.eq.s32.totalorder %s13, 0
    %p89 = por %p87, %p88
    %p90 = scmp.ne.s32.totalorder %s82, %s84
    %p91 = scmp.eq.s32.totalorder %s18, 1
    %p92 = por %p90, %p91
    %p93 = scmp.ne.s32.totalorder %s84, %s85
    %p94 = scmp.eq.s32.totalorder %s18, 0
    %p95 = por %p93, %p94
    %p96 = scmp.ne.s32.totalorder %s84, %s85
    %p97 = scmp.eq.s32.totalorder %s19, 1
    %p98 = por %p96, %p97
    %p100 = scmp.ne.s32.totalorder %s85, %s99
    %p101 = scmp.eq.s32.totalorder %s19, 0
    %p102 = por %p100, %p101
    %s104 = sadd.s32 %s103, 1
    %p107 = scmp.eq.s32.totalorder %s13, 1
    %p108 = scmp.ne.s32.totalorder %s103, %s105
    %p109 = scmp.eq.s32.totalorder %s13, 0
    %p110 = por %p108, %p109
    %p111 = scmp.ne.s32.totalorder %s103, %s105
    %p112 = scmp.eq.s32.totalorder %s18, 1
    %p113 = por %p111, %p112
    %p114 = scmp.ne.s32.totalorder %s105, %s106
    %p115 = scmp.eq.s32.totalorder %s18, 0
    %p116 = por %p114, %p115
    %p117 = scmp.ne.s32.totalorder %s105, %s106
    %p118 = scmp.eq.s32.totalorder %s19, 1
    %p119 = por %p117, %p118
    %p121 = scmp.ne.s32.totalorder %s106, %s120
    %p122 = scmp.eq.s32.totalorder %s19, 0
    %p123 = por %p121, %p122
    %s125 = sadd.s32 %s124, 1
    %p128 = scmp.eq.s32.totalorder %s13, 1
    %p129 = scmp.ne.s32.totalorder %s124, %s126
    %p130 = scmp.eq.s32.totalorder %s13, 0
    %p131 = por %p129, %p130
    %p132 = scmp.ne.s32.totalorder %s124, %s126
    %p133 = scmp.eq.s32.totalorder %s18, 1
    %p134 = por %p132, %p133
    %p135 = scmp.ne.s32.totalorder %s126, %s127
    %p136 = scmp.eq.s32.totalorder %s18, 0
    %p137 = por %p135, %p136
    %p138 = scmp.ne.s32.totalorder %s126, %s127
    %p139 = scmp.eq.s32.totalorder %s19, 1
    %p140 = por %p138, %p139
    %p142 = scmp.ne.s32.totalorder %s127, %s141
    %p143 = scmp.eq.s32.totalorder %s19, 0
    %p144 = por %p142, %p143
    %s146 = sadd.s32 %s145, 1
    %p149 = scmp.eq.s32.totalorder %s13, 1
    %p150 = scmp.ne.s32.totalorder %s145, %s147
    %p151 = scmp.eq.s32.totalorder %s13, 0
    %p152 = por %p150, %p151
    %p153 = scmp.ne.s32.totalorder %s145, %s147
    %p154 = scmp.eq.s32.totalorder %s18, 1
    %p155 = por %p153, %p154
    %p156 = scmp.ne.s32.totalorder %s147, %s148
    %p157 = scmp.eq.s32.totalorder %s18, 0
    %p158 = por %p156, %p157
    %p159 = scmp.ne.s32.totalorder %s147, %s148
    %p160 = scmp.eq.s32.totalorder %s19, 1
    %p161 = por %p159, %p160
    %p163 = scmp.ne.s32.totalorder %s148, %s162
    %p164 = scmp.eq.s32.totalorder %s19, 0
    %p165 = por %p163, %p164
    %s166 = ssub.s32 %s20, %s32
    %p167 = scmp.eq.s32.totalorder %s166, 0
    %s169 = sadd.s32 %s168, 1
    %s170 = scalar_select %p167, %s168, %s169
    %p173 = pneg %p167
    %p174 = scmp.eq.s32.totalorder %s13, 1
    %p175 = por %p173, %p174
    %p176 = scmp.ne.s32.totalorder %s168, %s171
    %p177 = scmp.eq.s32.totalorder %s13, 0
    %p178 = por %p176, %p177
    %p179 = scmp.ne.s32.totalorder %s168, %s171
    %p180 = scmp.eq.s32.totalorder %s18, 1
    %p181 = por %p179, %p180
    %p182 = scmp.ne.s32.totalorder %s171, %s172
    %p183 = scmp.eq.s32.totalorder %s18, 0
    %p184 = por %p182, %p183
    %p185 = scmp.ne.s32.totalorder %s171, %s172
    %p186 = scmp.eq.s32.totalorder %s19, 1
    %p187 = por %p185, %p186
    %p189 = scmp.ne.s32.totalorder %s172, %s188
    %p190 = scmp.eq.s32.totalorder %s19, 0
    %p191 = por %p189, %p190
    %p192 = scmp.le.s32.totalorder 1, %s13
    %p193 = scmp.lt.s32.totalorder %s13, 3
    %p194 = pnand %p192, %p193
    %p195 = pneg %p194
    // Predicated region
    $region9: #{tpu_custom_call.1} parent=5 // pred_check
      _
    $region10: #{tpu_custom_call.1} parent=5 // pred_check_branch
      %197 = sbr.rel (%p194) target = $region12
    $region11: #{tpu_custom_call.1} parent=5 // pred_region
      %s198 = ssub.s32 %s13, 1
      // Predicated region
      $region13: #{tpu_custom_call.1} parent=11 // pred_check
        %p199 = pneg %p74
      $region14: #{tpu_custom_call.1} parent=11 // pred_check_branch
        %201 = sbr.rel (%p199) target = $region16
      $region15: #{tpu_custom_call.1} parent=11 // pred_region
        _
      $region16: #{tpu_custom_call.1} parent=11 // pred_fallthru
        _
      // Predicated region
      $region17: #{tpu_custom_call.1} parent=11 // pred_check
        %p202 = pneg %p95
      $region18: #{tpu_custom_call.1} parent=11 // pred_check_branch
        %204 = sbr.rel (%p202) target = $region20
      $region19: #{tpu_custom_call.1} parent=11 // pred_region
        _
      $region20: #{tpu_custom_call.1} parent=11 // pred_fallthru
        _
      // Predicated region
      $region21: #{tpu_custom_call.1} parent=11 // pred_check
        %p205 = pneg %p116
      $region22: #{tpu_custom_call.1} parent=11 // pred_check_branch
        %207 = sbr.rel (%p205) target = $region24
      $region23: #{tpu_custom_call.1} parent=11 // pred_region
        _
      $region24: #{tpu_custom_call.1} parent=11 // pred_fallthru
        _
      // Predicated region
      $region25: #{tpu_custom_call.1} parent=11 // pred_check
        %p208 = pneg %p137
      $region26: #{tpu_custom_call.1} parent=11 // pred_check_branch
        %210 = sbr.rel (%p208) target = $region28
      $region27: #{tpu_custom_call.1} parent=11 // pred_region
        _
      $region28: #{tpu_custom_call.1} parent=11 // pred_fallthru
        _
      // Predicated region
      $region29: #{tpu_custom_call.1} parent=11 // pred_check
        %p211 = pneg %p158
      $region30: #{tpu_custom_call.1} parent=11 // pred_check_branch
        %213 = sbr.rel (%p211) target = $region32
      $region31: #{tpu_custom_call.1} parent=11 // pred_region
        _
      $region32: #{tpu_custom_call.1} parent=11 // pred_fallthru
        _
    $region12: #{tpu_custom_call.1} parent=5 // pred_fallthru
      _
    %p214 = scmp.lt.s32.totalorder %s13, 2
    // Predicated region
    $region33: #{tpu_custom_call.1} parent=5 // pred_check
      %p215 = pneg %p214
    $region34: #{tpu_custom_call.1} parent=5 // pred_check_branch
      %217 = sbr.rel (%p215) target = $region36
    $region35: #{tpu_custom_call.1} parent=5 // pred_region
      // Predicated region
      $region37: #{tpu_custom_call.1} parent=35 // pred_check
        %p218 = pneg %p47
      $region38: #{tpu_custom_call.1} parent=35 // pred_check_branch
        %220 = sbr.rel (%p218) target = $region40
      $region39: #{tpu_custom_call.1} parent=35 // pred_region
        %s221 = smul.u32 2, %s21
        %p222 = scmp.lt.s32.totalorder %s20, 1
        %s223 = scalar_select %p222, %s20, 1
        %p224 = scmp.lt.s32.totalorder %s221, 1
        %s225 = scalar_select %p224, %s221, 1
        %s226 = smul.addr %s223, 2
        %s227 = sadd.s32 %s225, %s226
        %s228 = smul.addr %s227, 2
        %s229 = scalar_lea.vmem %s0, %s228
        %s230 = smul.u32 2, %s21
      $region40: #{tpu_custom_call.1} parent=35 // pred_fallthru
        _
    $region36: #{tpu_custom_call.1} parent=5 // pred_fallthru
      _
    %p231 = scmp.le.s32.totalorder 1, %s13
    %p232 = scmp.lt.s32.totalorder %s13, 3
    %p233 = pnand %p231, %p232
    %p234 = pneg %p233
    // Predicated region
    $region41: #{tpu_custom_call.1} parent=5 // pred_check
      _
    $region42: #{tpu_custom_call.1} parent=5 // pred_check_branch
      %236 = sbr.rel (%p233) target = $region44
    $region43: #{tpu_custom_call.1} parent=5 // pred_region
      %s237 = ssub.s32 %s13, 1
      %s238 = smul.u32 2, %s23
      %p239 = scmp.lt.s32.totalorder %s22, 1
      %s240 = scalar_select %p239, %s22, 1
      %p241 = scmp.lt.s32.totalorder %s238, 1
      %s242 = scalar_select %p241, %s238, 1
      %s243 = smul.addr %s240, 2
      %s244 = sadd.s32 %s242, %s243
      %s245 = smul.addr %s244, 2
      %s246 = scalar_lea.vmem %s0, %s245
      %p247 = pneg %p53
      %p248 = pneg %p50
      %p249 = pneg %p74
      %p250 = pneg %p71
      %p251 = pneg %p95
      %p252 = pneg %p92
      %p253 = pneg %p116
      %p254 = pneg %p113
      %p255 = pneg %p137
      %p256 = pneg %p134
      %p257 = pneg %p158
      %p258 = pneg %p155
      %p259 = pneg %p184
      %p260 = pneg %p181
      %p261 = scmp.lt.s32.totalorder %s22, 1
      %s262 = scalar_select %p261, %s22, 1
      %s263 = smul.addr %s262, 2
      %s264 = smul.addr %s263, 8
      %s265 = scalar_lea.vmem %s6, %s264
      %s266 = smul.u32 2, %s23
      %p267 = scmp.lt.s32.totalorder %s22, 1
      %s268 = scalar_select %p267, %s22, 1
      %p269 = scmp.lt.s32.totalorder %s266, 1
      %s270 = scalar_select %p269, %s266, 1
      %s271 = smul.addr %s268, 2
      %s272 = sadd.s32 %s270, %s271
      %s273 = smul.addr %s272, 2
      %s274 = scalar_lea.vmem %s0, %s273
      %s275 = smul.u32 2, %s23
      %p276 = scmp.lt.s32.totalorder %s22, 1
      %s277 = scalar_select %p276, %s22, 1
      %s278 = smul.addr %s277, 2
      %s279 = smul.addr %s278, 8
      %s280 = scalar_lea.vmem %s6, %s279
      %p282 = scmp.eq.s32.totalorder %s23, 0
      // Predicated region
      $region45: #{tpu_custom_call.1} parent=43 // pred_check
        %p283 = pneg %p282
      $region46: #{tpu_custom_call.1} parent=43 // pred_check_branch
        %285 = sbr.rel (%p283) target = $region48
      $region47: #{tpu_custom_call.1} parent=43 // pred_region
        %vm286 = vcmask 7168
        %287 = vst.msk [vmem:[#allocation2] sm:$0xff] %vm286, 0.0
        %288 = vst.msk [vmem:[#allocation2 + $0x8] sm:$0xff] %vm286, 0.0
      $region48: #{tpu_custom_call.1} parent=43 // pred_fallthru
        _
      %v289 = vld [vmem:[%s1] sm:$0xf]
      %v290 = vld [vmem:[%s1 + $0x4] sm:$0xf]
      %v291 = vld [vmem:[%s274] sm:$0xf]
      %v292 = vld [vmem:[%s2] sm:$0xff]
      %v293 = vld [vmem:[%s2 + $0x8] sm:$0xff]
      %295 = vset.pattern.permute.xlu0 0
      %296 = vperm.xlu0 %295, %v292
      %v297 = vpop.permute.xlu0 %296
      %300 = vset.pattern.permute.xlu0 0
      %301 = vperm.xlu0 %300, %v293
      %v302 = vpop.permute.xlu0 %301
      %v306 = vunpack.c.l.b16 %v289
      %v307 = vunpack.c.l.b16 %v290
      %v308 = vpack.c.b16 %v307, %v306
      %v311 = vunpack.c.l.s4 1983009808
      %v312 = vunpack.c.0.s8 %v311
      %v313 = vlaneseq
      %v314 = vshrl.u32 %v313, 7
      %v315 = vsub.s32 %v312, %v314
      %v316 = vrot.slane %v291, %v315
      %v317 = vcombine.high %v316, %v316
      %vm318 = vcmask 31744
      %v320 = vsel %vm318, %v308, 0
      %vm322 = vcmask 1041408
      %v324 = vsel %vm322, %v316, 0
      %v327 = vsel %vm322, %v317, 0
      %329 = vmatprep.subr.bf16.mxu0 0
      %330 = vmatpush1.bf16.msra.mxu0 0
      %331 = vmatprep.subr.bf16.mxu0 0
      %332 = vmatpush1.bf16.msra.mxu0 0
      %333 = vmatprep.subr.bf16.mxu0 0
      %334 = vmatpush1.bf16.msra.mxu0 0
      %335 = vmatprep.subr.bf16.mxu0 0
      %336 = vmatpush1.bf16.msra.mxu0 0
      %337 = vmatprep.subr.bf16.mxu0 0
      %338 = vmatpush1.bf16.msra.mxu0 0
      %339 = vmatprep.subr.bf16.mxu0 0
      %340 = vmatpush1.bf16.msra.mxu0 0
      %341 = vmatprep.subr.bf16.mxu0 0
      %342 = vmatpush1.bf16.msra.mxu0 0
      %343 = vmatprep.subr.bf16.mxu0 %v327
      %344 = vmatpush1.bf16.msra.mxu0 %v324
      %345 = vmatprep.subr.bf16.mxu0 0
      %346 = vmatpush2.bf16.msra.mxu0 0
      %347 = vmatprep.subr.bf16.mxu0 0
      %348 = vmatpush2.bf16.msra.mxu0 0
      %349 = vmatprep.subr.bf16.mxu0 0
      %350 = vmatpush2.bf16.msra.mxu0 0
      %351 = vmatprep.subr.bf16.mxu0 0
      %352 = vmatpush2.bf16.msra.mxu0 0
      %353 = vmatprep.subr.bf16.mxu0 0
      %354 = vmatpush2.bf16.msra.mxu0 0
      %355 = vmatprep.subr.bf16.mxu0 0
      %356 = vmatpush2.bf16.msra.mxu0 0
      %357 = vmatprep.subr.bf16.mxu0 0
      %358 = vmatpush2.bf16.msra.mxu0 0
      %359 = vmatprep.subr.bf16.mxu0 0
      %360 = vmatpush2.bf16.msra.mxu0 0
      %361 = vmatprep.mubr.bf16.mxu0 0
      %362 = vmatmul.mubr.bf16.gmra.mxu0 %v320
      %v363 = vpop.f32.mrf.mxu0
      %v364 = vadd.f32 %v297, %v363
      %v365 = vpop.f32.mrf.mxu0
      %v366 = vadd.f32 %v297, %v365
      %v367 = vpop.f32.mrf.mxu0
      %v368 = vadd.f32 %v302, %v367
      %v369 = vpop.f32.mrf.mxu0
      %v370 = vadd.f32 %v302, %v369
      %371 = vdwg.mxu0
      %s372 = sld [smem:[#allocation3]]
      %vm373 = vcmp.gt.f32.partialorder %v364, 0.0
      %vm374 = vcmp.gt.f32.partialorder %v366, 0.0
      %vm375 = vcmp.gt.f32.partialorder %v368, 0.0
      %vm376 = vcmp.gt.f32.partialorder %v370, 0.0
      %v377 = vstv %s372
      %v378 = vmul.f32 %v377, %v364
      %v379 = vmul.f32 %v377, %v366
      %v380 = vmul.f32 %v377, %v368
      %v381 = vmul.f32 %v377, %v370
      %v382 = vsel %vm373, %v364, %v378
      %v383 = vsel %vm374, %v366, %v379
      %v384 = vsel %vm375, %v368, %v380
      %v385 = vsel %vm376, %v370, %v381
      %v386 = vld [vmem:[#allocation2] sm:$0xff]
      %v387 = vld [vmem:[#allocation2 + $0x8] sm:$0xff]
      %v388 = vadd.f32 %v382, %v383
      %389 = vadd.xlane.f32.xlu0 %v388
      %v390 = vpop.xlane.xlu0 %389
      %v391 = vadd.f32 %v384, %v385
      %392 = vadd.xlane.f32.xlu0 %v391
      %v393 = vpop.xlane.xlu0 %392
      %v394 = vadd.f32 %v386, %v390
      %v395 = vadd.f32 %v387, %v393
      %vm396 = vcmask 7168
      %397 = vst.msk [vmem:[#allocation2] sm:$0xff] %vm396, %v394
      %398 = vst.msk [vmem:[#allocation2 + $0x8] sm:$0xff] %vm396, %v395
      // Predicated region
      $region49: #{tpu_custom_call.1} parent=43 // pred_check
        %p399 = pneg %p282
      $region50: #{tpu_custom_call.1} parent=43 // pred_check_branch
        %401 = sbr.rel (%p399) target = $region52
      $region51: #{tpu_custom_call.1} parent=43 // pred_region
        %v402 = vld [vmem:[#allocation2] sm:$0xff]
        %v403 = vld [vmem:[#allocation2 + $0x8] sm:$0xff]
        %v404 = vmul.f32 %v402, 0.00390625
        %v405 = vmul.f32 %v403, 0.00390625
        %v406 = vld [vmem:[%s4] sm:$0xff]
        %v407 = vld [vmem:[%s4 + $0x8] sm:$0xff]
        %409 = vset.pattern.permute.xlu0 0
        %410 = vperm.xlu0 %409, %v404
        %v411 = vpop.permute.xlu0 %410
        %414 = vset.pattern.permute.xlu0 0
        %415 = vperm.xlu0 %414, %v405
        %v416 = vpop.permute.xlu0 %415
        %v418 = vmul.f32 %v406, %v411
        %v419 = vmul.f32 %v407, %v416
        %vm420 = vcmask 15360
        %v421 = vsel %vm420, %v418, 0.0
        %v422 = vsel %vm420, %v419, 0.0
        %v423 = vadd.f32 %v421, %v422
        %v424 = vrot.slane %v423, 4
        %v425 = vadd.f32 %v423, %v424
        %v426 = vrot.slane %v425, 2
        %v427 = vadd.f32 %v425, %v426
        %v428 = vrot.slane %v427, 1
        %v429 = vadd.f32 %v427, %v428
        %v430 = vmax.f32 %v429, 0.0
        %v431 = vld [vmem:[%s5] sm:$0xff]
        %v432 = vld [vmem:[%s5 + $0x8] sm:$0xff]
        %v433 = vmul.f32 %v431, %v430
        %v434 = vmul.f32 %v432, %v430
        %v435 = vsel %vm420, %v433, 0.0
        %436 = vadd.xlane.f32.xlu0 %v435
        %v437 = vpop.xlane.xlu0 %436
        %v438 = vsel %vm420, %v434, 0.0
        %439 = vadd.xlane.f32.xlu0 %v438
        %v440 = vpop.xlane.xlu0 %439
        %v441 = vxor.u32 %v437, 2147483648
        %v442 = vxor.u32 %v440, 2147483648
        %v443 = vmul.f32 %v441, 1.442695
        %v444 = vpow.pop %v443
        %v445 = vmul.f32 %v442, 1.442695
        %v446 = vpow.pop %v445
        %v447 = vadd.f32 %v444, 1.0
        %v448 = vadd.f32 %v446, 1.0
        %v449 = vrcp.pop %v447
        %v450 = vmul.f32 1.0, %v449
        %v451 = vrcp.pop %v448
        %v452 = vmul.f32 1.0, %v451
        %453 = vst.msk [vmem:[%s280] sm:$0xff] %vm396, %v450
        %454 = vst.msk [vmem:[%s280 + $0x8] sm:$0xff] %vm396, %v452
      $region52: #{tpu_custom_call.1} parent=43 // pred_fallthru
        _
      %p455 = scmp.lt.s32.totalorder %s22, 1
      %s456 = scalar_select %p455, %s22, 1
      %s457 = smul.addr %s456, 2
      %s458 = smul.addr %s457, 8
      %s459 = scalar_lea.vmem %s6, %s458
      // Predicated region
      $region53: #{tpu_custom_call.1} parent=43 // pred_check
        %p460 = pneg %p181
      $region54: #{tpu_custom_call.1} parent=43 // pred_check_branch
        %462 = sbr.rel (%p460) target = $region56
      $region55: #{tpu_custom_call.1} parent=43 // pred_region
        _
      $region56: #{tpu_custom_call.1} parent=43 // pred_fallthru
        _
    $region44: #{tpu_custom_call.1} parent=5 // pred_fallthru
      _
    %p463 = scmp.le.s32.totalorder 2, %s13
    // Predicated region
    $region57: #{tpu_custom_call.1} parent=5 // pred_check
      %p464 = pneg %p463
    $region58: #{tpu_custom_call.1} parent=5 // pred_check_branch
      %466 = sbr.rel (%p464) target = $region60
    $region59: #{tpu_custom_call.1} parent=5 // pred_region
      %s467 = ssub.s32 %s13, 2
      // Predicated region
      $region61: #{tpu_custom_call.1} parent=59 // pred_check
        %p468 = pneg %p187
      $region62: #{tpu_custom_call.1} parent=59 // pred_check_branch
        %470 = sbr.rel (%p468) target = $region64
      $region63: #{tpu_custom_call.1} parent=59 // pred_region
        %p471 = scmp.lt.s32.totalorder %s24, 1
        %s472 = scalar_select %p471, %s24, 1
        %s473 = smul.addr %s472, 2
        %s474 = smul.addr %s473, 8
        %s475 = scalar_lea.vmem %s6, %s474
      $region64: #{tpu_custom_call.1} parent=59 // pred_fallthru
        _
    $region60: #{tpu_custom_call.1} parent=5 // pred_fallthru
      _
  $region6: #{tpu_custom_call.1} parent=0 // loop_footer
    %s17 = sadd.s32 1, %s13
  $region7: #{tpu_custom_call.1} parent=0 // loop_footer_branch
    %12 = sbr.rel target = $region3
  $region8: #{tpu_custom_call.1} parent=0 // loop_exit
    _

</llo_original>
